<compile_context>
chip_gen: v5e
topology: v5e:2x2
jax: 0.10.0
libtpu: 0.0.40
codegen_flags: <defaults>
</compile_context>

<pallas_src>
import jax
import jax.numpy as jnp
from jax import lax
from jax.experimental import pallas as pl
from jax.experimental.pallas import tpu as pltpu

_LANE = 128
_SUB = 8
_CHUNK = 256   # rows per inner-loop step: keeps live intermediates ~128 KiB (vreg-friendly)


def _vfl_elementwise(pred, gt, label, alpha, gamma):
    """Per-element varifocal loss; pred/gt/label are f32 arrays, alpha/gamma python floats."""
    log_p_raw = jnp.log(pred)
    log_p = jnp.maximum(log_p_raw, -100.0)          # PyTorch BCE log clamp
    log_1mp = jnp.maximum(jnp.log(1.0 - pred), -100.0)
    if gamma == 2.0:
        focus = pred * pred                          # pure VPU
    elif float(gamma).is_integer():
        focus = lax.integer_pow(pred, int(gamma))    # pure VPU
    else:
        # reuse log(pred) already needed for BCE -> one fewer EUP transcendental
        focus = jnp.exp(gamma * log_p_raw)
    weight = alpha * focus * (1.0 - label) + gt * label
    bce = -(gt * log_p + (1.0 - gt) * log_1mp)
    return bce * weight


def _row_align(*dtypes):
    """Sublane alignment so each input dtype packs cleanly into its block."""
    a = _SUB
    for dt in dtypes:
        isz = jnp.dtype(dt).itemsize
        if isz < 4:
            a = max(a, _SUB * (4 // isz))            # bf16 -> 16 rows, int8/bool -> 32 rows
    return a


def _select_tiles(rows, tile_rows, align):
    """Pick (rows-per-block, rows-per-chunk, num_blocks)."""
    tile_rows = max(int(tile_rows), align)
    nb = -(-rows // tile_rows)
    if nb < 2 and rows >= 2 * align:
        nb = 2                                       # let v7x's 2nd TensorCore participate
    elif 2 < nb <= 16 and nb % 2 == 1:
        nb += 1                                      # keep small grids balanced across 2 TCs
    tr = -(-rows // nb)
    tr = -(-tr // align) * align                     # sublane / dtype packing alignment
    if tr >= _CHUNK:
        tr = -(-tr // _CHUNK) * _CHUNK               # inner chunk loop divides evenly
    chunk = _CHUNK if (tr >= _CHUNK and tr % _CHUNK == 0) else tr
    num_blocks = -(-rows // tr)
    return tr, chunk, num_blocks


def _make_varifocal_kernel(alpha, gamma, tr, chunk, rows, num_blocks):
    n_chunks = tr // chunk
    ragged = (rows % tr) != 0
    last_valid = rows - (num_blocks - 1) * tr        # valid rows in the final block

    def accumulate(pred_ref, gt_ref, label_ref, limit):
        # limit: python int (valid rows in this block) or None (block is full).
        def body(j, acc):
            r0 = j * chunk
            if n_chunks > 1:
                r0 = pl.multiple_of(r0, chunk)
            pred = pred_ref[pl.ds(r0, chunk), :].astype(jnp.float32)
            gt = gt_ref[pl.ds(r0, chunk), :].astype(jnp.float32)
            label = label_ref[pl.ds(r0, chunk), :].astype(jnp.float32)
            prod = _vfl_elementwise(pred, gt, label, alpha, gamma)
            if limit is not None:
                # mask rows past the end of real data (only the last ragged block)
                row = lax.broadcasted_iota(jnp.int32, (chunk, _LANE), 0)
                prod = jnp.where(row < (limit - r0), prod, 0.0)
            # cheap VPU reduction across vreg groups -> (8,128) partial
            return acc + jnp.sum(prod.reshape(chunk // _SUB, _SUB, _LANE), axis=0)

        acc0 = jnp.zeros((_SUB, _LANE), jnp.float32)
        if n_chunks == 1:
            return body(0, acc0)
        return lax.fori_loop(0, n_chunks, body, acc0, unroll=True)

    def kernel(pred_ref, gt_ref, label_ref, out_ref):
        if not ragged:
            out_ref[...] = accumulate(pred_ref, gt_ref, label_ref, None)[None]
        elif num_blocks == 1:
            out_ref[...] = accumulate(pred_ref, gt_ref, label_ref, last_valid)[None]
        else:
            last = num_blocks - 1

            @pl.when(pl.program_id(0) != last)
            def _():
                out_ref[...] = accumulate(pred_ref, gt_ref, label_ref, None)[None]

            @pl.when(pl.program_id(0) == last)
            def _():
                out_ref[...] = accumulate(pred_ref, gt_ref, label_ref, last_valid)[None]

    return kernel


def varifocal_loss(pred_score, gt_score, label, alpha=0.75, gamma=2.0,
                   tile_rows=2048):
    """Sum-reduced varifocal loss.  Inputs may use narrow dtypes (e.g. bf16
    gt_score, int8/bool label); they are cast to f32 on the VPU in-kernel."""
    alpha = float(alpha)
    gamma = float(gamma)

    n = pred_score.size
    pred_f = jnp.ravel(pred_score)
    gt_f = jnp.ravel(gt_score)
    lbl_f = jnp.ravel(label)

    rows = n // _LANE
    rem = n - rows * _LANE

    total = jnp.zeros((), jnp.float32)

    if rows > 0:
        align = _row_align(pred_f.dtype, gt_f.dtype, lbl_f.dtype)
        tr, chunk, num_blocks = _select_tiles(rows, tile_rows, align)
        body_n = rows * _LANE

        def lead(x):
            # contiguous prefix + layout-preserving reshape: NO pad copy
            x = x if body_n == n else x[:body_n]
            return x.reshape(rows, _LANE)

        p2, g2, l2 = lead(pred_f), lead(gt_f), lead(lbl_f)

        # VMEM budget: 3 double-buffered input tiles + small chunk intermediates.
        tile_bytes = tr * _LANE * (p2.dtype.itemsize + g2.dtype.itemsize +
                                   l2.dtype.itemsize)
        vmem_need = 2 * tile_bytes + (2 << 20)
        cp_kwargs = dict(dimension_semantics=("parallel",))
        if vmem_need > (14 << 20):      # only when beyond v5e's 16 MiB scoped default
            cp_kwargs["vmem_limit_bytes"] = int(min(vmem_need, 100 << 20))

        partials = pl.pallas_call(
            _make_varifocal_kernel(alpha, gamma, tr, chunk, rows, num_blocks),
            out_shape=jax.ShapeDtypeStruct((num_blocks, _SUB, _LANE), jnp.float32),
            grid_spec=pltpu.PrefetchScalarGridSpec(
                num_scalar_prefetch=0,
                grid=(num_blocks,),
                in_specs=[
                    pl.BlockSpec((tr, _LANE), lambda i: (i, 0)),
                    pl.BlockSpec((tr, _LANE), lambda i: (i, 0)),
                    pl.BlockSpec((tr, _LANE), lambda i: (i, 0)),
                ],
                out_specs=pl.BlockSpec((1, _SUB, _LANE), lambda i: (i, 0, 0)),
            ),
            compiler_params=pltpu.CompilerParams(**cp_kwargs),
        )(p2, g2, l2)

        # tiny final reduction over per-block (8,128) partials
        total = total + jnp.sum(partials)

    if rem > 0:
        # <128-element lane remainder: trivially small, fused by XLA.
        off = rows * _LANE
        pt = pred_f[off:].astype(jnp.float32)
        gtt = gt_f[off:].astype(jnp.float32)
        lt = lbl_f[off:].astype(jnp.float32)
        total = total + jnp.sum(_vfl_elementwise(pt, gtt, lt, alpha, gamma))

    return total


def varifocal_loss_ref(pred_score, gt_score, label, alpha=0.75, gamma=2.0):
    pred = pred_score.astype(jnp.float32)
    gt = gt_score.astype(jnp.float32)
    lbl = label.astype(jnp.float32)
    weight = alpha * (pred ** gamma) * (1.0 - lbl) + gt * lbl
    log_p = jnp.maximum(jnp.log(pred), -100.0)
    log_1mp = jnp.maximum(jnp.log(1.0 - pred), -100.0)
    bce = -(gt * log_p + (1.0 - gt) * log_1mp)
    return jnp.sum(bce * weight)


if __name__ == "__main__":
    key = jax.random.PRNGKey(0)
    k1, k2, k3 = jax.random.split(key, 3)

    # 1) small NCHW head scores (lane-aligned: 2*4*16*16 = 2048 elements)
    shape = (2, 4, 16, 16)
    pred_score = jax.nn.sigmoid(jax.random.normal(k1, shape, dtype=jnp.float32))
    gt_score = jax.random.uniform(k2, shape, dtype=jnp.float32)
    label = (jax.random.uniform(k3, shape) > 0.5).astype(jnp.float32)

    loss = jax.block_until_ready(varifocal_loss(pred_score, gt_score, label))
    ref = varifocal_loss_ref(pred_score, gt_score, label)
    assert jnp.allclose(loss, ref, rtol=1e-5, atol=1e-4), (loss, ref)

    # 2) ragged shape (3*5*7*11 = 1155 = 9*128 + 3): exercises the in-kernel
    #    row mask and the <128-element JAX tail -- no jnp.pad copy anywhere.
    shape2 = (3, 5, 7, 11)
    p = jax.nn.sigmoid(jax.random.normal(k1, shape2, dtype=jnp.float32))
    g = jax.random.uniform(k2, shape2, dtype=jnp.float32)
    l = (jax.random.uniform(k3, shape2) > 0.5).astype(jnp.float32)
    loss2 = jax.block_until_ready(varifocal_loss(p, g, l))
    ref2 = varifocal_loss_ref(p, g, l)
    assert jnp.allclose(loss2, ref2, rtol=1e-5, atol=1e-4), (loss2, ref2)

    # 3) narrow-dtype streams (bf16 gt_score, int8 label) -> ~25% less HBM traffic.
    shape3 = (4, 8, 32, 32)
    p3 = jax.nn.sigmoid(jax.random.normal(k1, shape3, dtype=jnp.float32))
    g3 = jax.random.uniform(k2, shape3, dtype=jnp.float32).astype(jnp.bfloat16)
    l3 = (jax.random.uniform(k3, shape3) > 0.5).astype(jnp.int8)
    loss3 = jax.block_until_ready(varifocal_loss(p3, g3, l3))
    ref3 = varifocal_loss_ref(p3, g3.astype(jnp.float32), l3.astype(jnp.float32))
    assert jnp.allclose(loss3, ref3, rtol=1e-4, atol=1e-2), (loss3, ref3)

    print("KERNEL_OK")
</pallas_src>

<mosaic_0001>
module attributes {stable_mosaic.version = 11 : i64} {
  func.func @kernel(%arg0: i32, %arg1: memref<8x128xf32, #tpu.memory_space<vmem>>, %arg2: memref<8x128xf32, #tpu.memory_space<vmem>>, %arg3: memref<8x128xf32, #tpu.memory_space<vmem>>, %arg4: memref<1x8x128xf32, #tpu.memory_space<vmem>>) attributes {dimension_semantics = [#tpu.dimension_semantics<parallel>], iteration_bounds = array<i64: 2>, scalar_prefetch = 0 : i64, scratch_operands = 0 : i64, tpu.core_type = #tpu.core_type<tc>, window_params = [{transform_indices = @transform_0, window_bounds = array<i64: 8, 128>}, {transform_indices = @transform_1, window_bounds = array<i64: 8, 128>}, {transform_indices = @transform_2, window_bounds = array<i64: 8, 128>}, {transform_indices = @transform_3, window_bounds = array<i64: 1, 8, 128>}]} {
    %cst = arith.constant 0.000000e+00 : f32
    %0 = vector.broadcast %cst : f32 to vector<8x128xf32>
    %c0 = arith.constant 0 : index
    %c0_0 = arith.constant 0 : index
    %1 = vector.load %arg1[%c0, %c0_0] : memref<8x128xf32, #tpu.memory_space<vmem>>, vector<8x128xf32>
    %c0_1 = arith.constant 0 : index
    %c0_2 = arith.constant 0 : index
    %2 = vector.load %arg2[%c0_1, %c0_2] : memref<8x128xf32, #tpu.memory_space<vmem>>, vector<8x128xf32>
    %c0_3 = arith.constant 0 : index
    %c0_4 = arith.constant 0 : index
    %3 = vector.load %arg3[%c0_3, %c0_4] : memref<8x128xf32, #tpu.memory_space<vmem>>, vector<8x128xf32>
    %4 = math.log %1 : vector<8x128xf32>
    %cst_5 = arith.constant -1.000000e+02 : f32
    %5 = vector.broadcast %cst_5 : f32 to vector<8x128xf32>
    %6 = arith.maximumf %4, %5 : vector<8x128xf32>
    %cst_6 = arith.constant 1.000000e+00 : f32
    %7 = vector.broadcast %cst_6 : f32 to vector<8x128xf32>
    %8 = arith.subf %7, %1 : vector<8x128xf32>
    %9 = math.log %8 : vector<8x128xf32>
    %cst_7 = arith.constant -1.000000e+02 : f32
    %10 = vector.broadcast %cst_7 : f32 to vector<8x128xf32>
    %11 = arith.maximumf %9, %10 : vector<8x128xf32>
    %12 = arith.mulf %1, %1 : vector<8x128xf32>
    %cst_8 = arith.constant 7.500000e-01 : f32
    %13 = vector.broadcast %cst_8 : f32 to vector<8x128xf32>
    %14 = arith.mulf %13, %12 : vector<8x128xf32>
    %cst_9 = arith.constant 1.000000e+00 : f32
    %15 = vector.broadcast %cst_9 : f32 to vector<8x128xf32>
    %16 = arith.subf %15, %3 : vector<8x128xf32>
    %17 = arith.mulf %14, %16 : vector<8x128xf32>
    %18 = arith.mulf %2, %3 : vector<8x128xf32>
    %19 = arith.addf %17, %18 : vector<8x128xf32>
    %20 = arith.mulf %2, %6 : vector<8x128xf32>
    %cst_10 = arith.constant 1.000000e+00 : f32
    %21 = vector.broadcast %cst_10 : f32 to vector<8x128xf32>
    %22 = arith.subf %21, %2 : vector<8x128xf32>
    %23 = arith.mulf %22, %11 : vector<8x128xf32>
    %24 = arith.addf %20, %23 : vector<8x128xf32>
    %cst_11 = arith.constant 0.000000e+00 : f32
    %25 = vector.broadcast %cst_11 : f32 to vector<8x128xf32>
    %26 = arith.subf %25, %24 : vector<8x128xf32>
    %27 = arith.mulf %26, %19 : vector<8x128xf32>
    %28 = vector.shape_cast %27 : vector<8x128xf32> to vector<1x8x128xf32>
    %cst_12 = arith.constant dense<0.000000e+00> : vector<8x128xf32>
    %29 = vector.multi_reduction <add>, %28, %cst_12 [0] : vector<1x8x128xf32> to vector<8x128xf32>
    %30 = arith.addf %0, %29 : vector<8x128xf32>
    %31 = vector.shape_cast %30 : vector<8x128xf32> to vector<1x8x128xf32>
    %c0_13 = arith.constant 0 : index
    %c0_14 = arith.constant 0 : index
    %c0_15 = arith.constant 0 : index
    %32 = vector.load %arg4[%c0_13, %c0_14, %c0_15] : memref<1x8x128xf32, #tpu.memory_space<vmem>>, vector<1x8x128xf32>
    tpu.vector_store %arg4[%c0_13, %c0_14, %c0_15], %31 {strides = array<i32>} : memref<1x8x128xf32, #tpu.memory_space<vmem>>, vector<1x8x128xf32>,
    return
  }
  func.func @transform_0(%arg0: i32) -> (i32, i32) {
    %c0_i32 = arith.constant 0 : i32
    %c0_i32_0 = arith.constant 0 : i32
    return %arg0, %c0_i32 : i32, i32
  }
  func.func @transform_1(%arg0: i32) -> (i32, i32) {
    %c0_i32 = arith.constant 0 : i32
    %c0_i32_0 = arith.constant 0 : i32
    return %arg0, %c0_i32 : i32, i32
  }
  func.func @transform_2(%arg0: i32) -> (i32, i32) {
    %c0_i32 = arith.constant 0 : i32
    %c0_i32_0 = arith.constant 0 : i32
    return %arg0, %c0_i32 : i32, i32
  }
  func.func @transform_3(%arg0: i32) -> (i32, i32, i32) {
    %c0_i32 = arith.constant 0 : i32
    %c0_i32_0 = arith.constant 0 : i32
    %c0_i32_1 = arith.constant 0 : i32
    return %arg0, %c0_i32, %c0_i32_0 : i32, i32, i32
  }
}

</mosaic_0001>

<llo_original>
// kernel: tpu_custom_call.1
$region0: #{tpu_custom_call.1}
  #allocation0 [shape = 'u32[]', space=smem, size = 0x4, offset = 0x4, fixed_abs, tag = 'smem constant byte address 0x4 - core index']
  #allocation1 [shape = 'u32[72,128]{1,0:T(1,128)}', space=vmem, size = 0x9000, scoped, tag = 'internal scratch']
  %s0 = inlined_call_operand.hbm [shape: f32[16,128], index: 0, kind: input, shape index: {}]
  %s1 = inlined_call_operand.hbm [shape: f32[16,128], index: 1, kind: input, shape index: {}]
  %s2 = inlined_call_operand.hbm [shape: f32[16,128], index: 2, kind: input, shape index: {}]
  %s3 = inlined_call_operand.hbm [shape: f32[2,8,128], index: 3, kind: output, shape index: {}]
  %s4 = sld [smem:[#allocation0]]
  $region57: #{tpu_custom_call.1} parent=0
    _
  %s6 = ssub.s32 1, %s4
  %s7 = scalar_select 0, %s6, %s4
  $region1: #{tpu_custom_call.1} parent=0
    #allocation2 [shape = 'u8[8192]{0}', space=vmem, size = 0x2000, scoped, tag = 'input window, operand 0']
    #allocation3 [shape = 's32[2]{0}', space=sflag, size = 0x8, scoped, tag = 'scoped memory for tpu_custom_call.1']
    #allocation4 [shape = 's32[2]{0}', space=sflag, size = 0x8, scoped, tag = 'scoped memory for tpu_custom_call.1']
    #allocation5 [shape = 'u8[8192]{0}', space=vmem, size = 0x2000, scoped, tag = 'input window, operand 1']
    #allocation6 [shape = 's32[2]{0}', space=sflag, size = 0x8, scoped, tag = 'scoped memory for tpu_custom_call.1']
    #allocation7 [shape = 'u8[8192]{0}', space=vmem, size = 0x2000, scoped, tag = 'input window, operand 2']
    #allocation8 [shape = 'u8[8192]{0}', space=vmem, size = 0x2000, scoped, tag = 'output window, operand 0']
    %8 = vsyncpa [#allocation3], 0
    %s9 = scalar_lea.sflag [#allocation3], 1
    %10 = vsyncpa %s9, 0
    %11 = vsyncpa [#allocation6], 0
    %s12 = scalar_lea.sflag [#allocation6], 1
    %13 = vsyncpa %s12, 0
    %14 = vsyncpa [#allocation4], 0
    %s15 = scalar_lea.sflag [#allocation4], 1
    %16 = vsyncpa %s15, 0
    loop: start=0, step=1, limit=4
    $region2: #{tpu_custom_call.1} parent=1 // loop_pre_header
      _
    $region3: #{tpu_custom_call.1} parent=1 // loop_header
      %s18 = sphi 0, %s22
      %p19 = scmp.ge.s32.totalorder %s18, 4
      %s28 = sphi 0, %s30
      %s31 = sphi 0, %s28
      %s32 = sphi 0, %s31
      %s48 = sphi 0, %s32
      %s54 = sphi 0, %s56
      %s57 = sphi 0, %s54
      %s58 = sphi 0, %s57
      %s74 = sphi 0, %s58
      %s80 = sphi 0, %s82
      %s83 = sphi 0, %s80
      %s84 = sphi 0, %s83
      %s100 = sphi 0, %s84
      %s106 = sphi 0, %s108
      %s109 = sphi 0, %s106
      %s110 = sphi 0, %s109
      %s126 = sphi 0, %s110
    $region4: #{tpu_custom_call.1} parent=1 // loop_header_branch
      %21 = sbr.rel (%p19) target = $region8
    $region5: #{tpu_custom_call.1} parent=1 // loop_body
      %s23 = ssub.s32 %s18, 1
      %s24 = ssub.s32 %s18, 2
      %s25 = sadd.s32 %s18, 1
      %s26 = ssub.s32 %s18, %s25
      %p27 = scmp.eq.s32.totalorder %s26, 0
      %s29 = sadd.s32 %s28, 1
      %s30 = scalar_select %p27, %s28, %s29
      %p33 = pneg %p27
      %p34 = scmp.eq.s32.totalorder %s18, 1
      %p35 = por %p33, %p34
      %p36 = scmp.ne.s32.totalorder %s28, %s31
      %p37 = scmp.eq.s32.totalorder %s18, 0
      %p38 = por %p36, %p37
      %p39 = scmp.ne.s32.totalorder %s28, %s31
      %p40 = scmp.eq.s32.totalorder %s23, 1
      %p41 = por %p39, %p40
      %p42 = scmp.ne.s32.totalorder %s31, %s32
      %p43 = scmp.eq.s32.totalorder %s23, 0
      %p44 = por %p42, %p43
      %p45 = scmp.ne.s32.totalorder %s31, %s32
      %p46 = scmp.eq.s32.totalorder %s24, 1
      %p47 = por %p45, %p46
      %p49 = scmp.ne.s32.totalorder %s32, %s48
      %p50 = scmp.eq.s32.totalorder %s24, 0
      %p51 = por %p49, %p50
      %s52 = ssub.s32 %s18, %s25
      %p53 = scmp.eq.s32.totalorder %s52, 0
      %s55 = sadd.s32 %s54, 1
      %s56 = scalar_select %p53, %s54, %s55
      %p59 = pneg %p53
      %p60 = scmp.eq.s32.totalorder %s18, 1
      %p61 = por %p59, %p60
      %p62 = scmp.ne.s32.totalorder %s54, %s57
      %p63 = scmp.eq.s32.totalorder %s18, 0
      %p64 = por %p62, %p63
      %p65 = scmp.ne.s32.totalorder %s54, %s57
      %p66 = scmp.eq.s32.totalorder %s23, 1
      %p67 = por %p65, %p66
      %p68 = scmp.ne.s32.totalorder %s57, %s58
      %p69 = scmp.eq.s32.totalorder %s23, 0
      %p70 = por %p68, %p69
      %p71 = scmp.ne.s32.totalorder %s57, %s58
      %p72 = scmp.eq.s32.totalorder %s24, 1
      %p73 = por %p71, %p72
      %p75 = scmp.ne.s32.totalorder %s58, %s74
      %p76 = scmp.eq.s32.totalorder %s24, 0
      %p77 = por %p75, %p76
      %s78 = ssub.s32 %s18, %s25
      %p79 = scmp.eq.s32.totalorder %s78, 0
      %s81 = sadd.s32 %s80, 1
      %s82 = scalar_select %p79, %s80, %s81
      %p85 = pneg %p79
      %p86 = scmp.eq.s32.totalorder %s18, 1
      %p87 = por %p85, %p86
      %p88 = scmp.ne.s32.totalorder %s80, %s83
      %p89 = scmp.eq.s32.totalorder %s18, 0
      %p90 = por %p88, %p89
      %p91 = scmp.ne.s32.totalorder %s80, %s83
      %p92 = scmp.eq.s32.totalorder %s23, 1
      %p93 = por %p91, %p92
      %p94 = scmp.ne.s32.totalorder %s83, %s84
      %p95 = scmp.eq.s32.totalorder %s23, 0
      %p96 = por %p94, %p95
      %p97 = scmp.ne.s32.totalorder %s83, %s84
      %p98 = scmp.eq.s32.totalorder %s24, 1
      %p99 = por %p97, %p98
      %p101 = scmp.ne.s32.totalorder %s84, %s100
      %p102 = scmp.eq.s32.totalorder %s24, 0
      %p103 = por %p101, %p102
      %s104 = ssub.s32 %s18, %s25
      %p105 = scmp.eq.s32.totalorder %s104, 0
      %s107 = sadd.s32 %s106, 1
      %s108 = scalar_select %p105, %s106, %s107
      %p111 = pneg %p105
      %p112 = scmp.eq.s32.totalorder %s18, 1
      %p113 = por %p111, %p112
      %p114 = scmp.ne.s32.totalorder %s106, %s109
      %p115 = scmp.eq.s32.totalorder %s18, 0
      %p116 = por %p114, %p115
      %p117 = scmp.ne.s32.totalorder %s106, %s109
      %p118 = scmp.eq.s32.totalorder %s23, 1
      %p119 = por %p117, %p118
      %p120 = scmp.ne.s32.totalorder %s109, %s110
      %p121 = scmp.eq.s32.totalorder %s23, 0
      %p122 = por %p120, %p121
      %p123 = scmp.ne.s32.totalorder %s109, %s110
      %p124 = scmp.eq.s32.totalorder %s24, 1
      %p125 = por %p123, %p124
      %p127 = scmp.ne.s32.totalorder %s110, %s126
      %p128 = scmp.eq.s32.totalorder %s24, 0
      %p129 = por %p127, %p128
      %p130 = scmp.le.s32.totalorder 1, %s18
      %p131 = scmp.lt.s32.totalorder %s18, 3
      %p132 = pnand %p130, %p131
      %p133 = pneg %p132
      // Predicated region
      $region9: #{tpu_custom_call.1} parent=5 // pred_check
        _
      $region10: #{tpu_custom_call.1} parent=5 // pred_check_branch
        %135 = sbr.rel (%p132) target = $region12
      $region11: #{tpu_custom_call.1} parent=5 // pred_region
        %s136 = ssub.s32 %s18, 1
      $region12: #{tpu_custom_call.1} parent=5 // pred_fallthru
        _
      %p137 = scmp.lt.s32.totalorder %s18, 2
      // Predicated region
      $region13: #{tpu_custom_call.1} parent=5 // pred_check
        %p138 = pneg %p137
      $region14: #{tpu_custom_call.1} parent=5 // pred_check_branch
        %140 = sbr.rel (%p138) target = $region16
      $region15: #{tpu_custom_call.1} parent=5 // pred_region
        // Predicated region
        $region17: #{tpu_custom_call.1} parent=15 // pred_check
          %p141 = pneg %p38
        $region18: #{tpu_custom_call.1} parent=15 // pred_check_branch
          %143 = sbr.rel (%p141) target = $region20
        $region19: #{tpu_custom_call.1} parent=15 // pred_region
          %s144 = sand.u32 %s28, 1
          %s145 = scalar_lea.sflag [#allocation3], %s144
          %s146 = sand.u32 %s28, 1
          %s147 = smul.addr %s146, 8
          %s148 = scalar_lea.vmem [#allocation2], %s147
          %150 = vsyncadd %s145, 0
          %s151 = smul.addr %s18, 8
          %s152 = scalar_lea.hbm %s0, %s151
          %s154 = sshll.u32 %s152, 4
          %s155 = int_to_ptr.hbm [resolvable:$true] %s154
          %s156 = sshll.u32 %s148, 4
          %s157 = int_to_ptr.vmem [resolvable:$true] %s156
          %159 = dma.hbm_to_vmem [thread:$0]  %s155, 128, %s157, %s145
        $region20: #{tpu_custom_call.1} parent=15 // pred_fallthru
          _
        // Predicated region
        $region21: #{tpu_custom_call.1} parent=15 // pred_check
          %p160 = pneg %p64
        $region22: #{tpu_custom_call.1} parent=15 // pred_check_branch
          %162 = sbr.rel (%p160) target = $region24
        $region23: #{tpu_custom_call.1} parent=15 // pred_region
          %s163 = sand.u32 %s18, 1
          %s164 = scalar_lea.sflag [#allocation6], %s163
          %s165 = sand.u32 %s54, 1
          %s166 = smul.addr %s165, 8
          %s167 = scalar_lea.vmem [#allocation5], %s166
          %169 = vsyncadd %s164, 0
          %s170 = smul.addr %s18, 8
          %s171 = scalar_lea.hbm %s1, %s170
          %s173 = sshll.u32 %s171, 4
          %s174 = int_to_ptr.hbm [resolvable:$true] %s173
          %s175 = sshll.u32 %s167, 4
          %s176 = int_to_ptr.vmem [resolvable:$true] %s175
          %178 = dma.hbm_to_vmem [thread:$0]  %s174, 128, %s176, %s164
        $region24: #{tpu_custom_call.1} parent=15 // pred_fallthru
          _
        // Predicated region
        $region25: #{tpu_custom_call.1} parent=15 // pred_check
          %p179 = pneg %p90
        $region26: #{tpu_custom_call.1} parent=15 // pred_check_branch
          %181 = sbr.rel (%p179) target = $region28
        $region27: #{tpu_custom_call.1} parent=15 // pred_region
          %s182 = sand.u32 %s18, 1
          %s183 = scalar_lea.sflag [#allocation6], %s182
          %s184 = sand.u32 %s80, 1
          %s185 = smul.addr %s184, 8
          %s186 = scalar_lea.vmem [#allocation7], %s185
          %188 = vsyncadd %s183, 0
          %s189 = smul.addr %s18, 8
          %s190 = scalar_lea.hbm %s2, %s189
          %s192 = sshll.u32 %s190, 4
          %s193 = int_to_ptr.hbm [resolvable:$true] %s192
          %s194 = sshll.u32 %s186, 4
          %s195 = int_to_ptr.vmem [resolvable:$true] %s194
          %197 = dma.hbm_to_vmem [thread:$0]  %s193, 128, %s195, %s183
        $region28: #{tpu_custom_call.1} parent=15 // pred_fallthru
          _
      $region16: #{tpu_custom_call.1} parent=5 // pred_fallthru
        _
      %p198 = scmp.le.s32.totalorder 1, %s18
      %p199 = scmp.lt.s32.totalorder %s18, 3
      %p200 = pnand %p198, %p199
      %p201 = pneg %p200
      // Predicated region
      $region29: #{tpu_custom_call.1} parent=5 // pred_check
        _
      $region30: #{tpu_custom_call.1} parent=5 // pred_check_branch
        %203 = sbr.rel (%p200) target = $region32
      $region31: #{tpu_custom_call.1} parent=5 // pred_region
        %s204 = ssub.s32 %s18, 1
        %s205 = sand.u32 %s31, 1
        %s206 = scalar_lea.sflag [#allocation3], %s205
        %s207 = sand.u32 %s31, 1
        %s208 = smul.addr %s207, 8
        %s209 = scalar_lea.vmem [#allocation2], %s208
        // Predicated region
        $region33: #{tpu_custom_call.1} parent=31 // pred_check
          %p210 = pneg %p44
        $region34: #{tpu_custom_call.1} parent=31 // pred_check_branch
          %212 = sbr.rel (%p210) target = $region36
        $region35: #{tpu_custom_call.1} parent=31 // pred_region
          %214 = dma.done %s206, 128
        $region36: #{tpu_custom_call.1} parent=31 // pred_fallthru
          _
        %s215 = sand.u32 %s23, 1
        %s216 = scalar_lea.sflag [#allocation6], %s215
        %s217 = sand.u32 %s57, 1
        %s218 = smul.addr %s217, 8
        %s219 = scalar_lea.vmem [#allocation5], %s218
        // Predicated region
        $region37: #{tpu_custom_call.1} parent=31 // pred_check
          %p220 = pneg %p70
        $region38: #{tpu_custom_call.1} parent=31 // pred_check_branch
          %222 = sbr.rel (%p220) target = $region40
        $region39: #{tpu_custom_call.1} parent=31 // pred_region
          %224 = dma.done %s216, 128
        $region40: #{tpu_custom_call.1} parent=31 // pred_fallthru
          _
        %s225 = sand.u32 %s23, 1
        %s226 = scalar_lea.sflag [#allocation6], %s225
        %s227 = sand.u32 %s83, 1
        %s228 = smul.addr %s227, 8
        %s229 = scalar_lea.vmem [#allocation7], %s228
        // Predicated region
        $region41: #{tpu_custom_call.1} parent=31 // pred_check
          %p230 = pneg %p96
        $region42: #{tpu_custom_call.1} parent=31 // pred_check_branch
          %232 = sbr.rel (%p230) target = $region44
        $region43: #{tpu_custom_call.1} parent=31 // pred_region
          %234 = dma.done %s226, 128
        $region44: #{tpu_custom_call.1} parent=31 // pred_fallthru
          _
        %s235 = sand.u32 %s31, 1
        %s236 = scalar_lea.sflag [#allocation3], %s235
        %s237 = sand.u32 %s31, 1
        %s238 = smul.addr %s237, 8
        %s239 = scalar_lea.vmem [#allocation2], %s238
        %p240 = pneg %p44
        %p241 = pneg %p41
        %s242 = sand.u32 %s23, 1
        %s243 = scalar_lea.sflag [#allocation6], %s242
        %s244 = sand.u32 %s57, 1
        %s245 = smul.addr %s244, 8
        %s246 = scalar_lea.vmem [#allocation5], %s245
        %p247 = pneg %p70
        %p248 = pneg %p67
        %s249 = sand.u32 %s23, 1
        %s250 = scalar_lea.sflag [#allocation6], %s249
        %s251 = sand.u32 %s83, 1
        %s252 = smul.addr %s251, 8
        %s253 = scalar_lea.vmem [#allocation7], %s252
        %p254 = pneg %p96
        %p255 = pneg %p93
        %p256 = pneg %p122
        %p257 = pneg %p119
        %s258 = sand.u32 %s109, 1
        %s259 = scalar_lea.sflag [#allocation4], %s258
        %s260 = sand.u32 %s109, 1
        %s261 = smul.addr %s260, 8
        %s262 = scalar_lea.vmem [#allocation8], %s261
        %v263 = vld [vmem:[%s209] sm:$0xff]
        %v264 = vld [vmem:[%s219] sm:$0xff]
        %v265 = vld [vmem:[%s229] sm:$0xff]
        %v266 = vlog2.pop %v263
        %v267 = vmul.f32 %v266, 0.6931472
        %v268 = vmax.f32 %v267, -100.0
        %v269 = vsub.f32 1.0, %v263
        %v270 = vlog2.pop %v269
        %v271 = vmul.f32 %v270, 0.6931472
        %v272 = vmax.f32 %v271, -100.0
        %v273 = vmul.f32 %v263, %v263
        %v274 = vmul.f32 %v273, 0.75
        %v275 = vsub.f32 1.0, %v265
        %v276 = vmul.f32 %v274, %v275
        %v277 = vmul.f32 %v264, %v265
        %v278 = vadd.f32 %v276, %v277
        %v279 = vmul.f32 %v264, %v268
        %v280 = vsub.f32 1.0, %v264
        %v281 = vmul.f32 %v280, %v272
        %v282 = vadd.f32 %v279, %v281
        %v283 = vsub.f32 0.0, %v282
        %v284 = vmul.f32 %v283, %v278
        %v285 = vadd.f32 %v284, 0.0
        %v286 = vadd.f32 %v285, 0.0
        %287 = vst [vmem:[%s262] sm:$0xff] %v286
        %s288 = sand.u32 %s109, 1
        %s289 = scalar_lea.sflag [#allocation4], %s288
        %s290 = sand.u32 %s109, 1
        %s291 = smul.addr %s290, 8
        %s292 = scalar_lea.vmem [#allocation8], %s291
        // Predicated region
        $region45: #{tpu_custom_call.1} parent=31 // pred_check
          %p293 = pneg %p119
        $region46: #{tpu_custom_call.1} parent=31 // pred_check_branch
          %295 = sbr.rel (%p293) target = $region48
        $region47: #{tpu_custom_call.1} parent=31 // pred_region
          %297 = vsyncadd %s289, 0
          %s298 = smul.addr %s23, 8
          %s299 = scalar_lea.hbm %s3, %s298
          %s301 = sshll.u32 %s292, 4
          %s302 = int_to_ptr.vmem [resolvable:$true] %s301
          %s303 = sshll.u32 %s299, 4
          %s304 = int_to_ptr.hbm [resolvable:$true] %s303
          %306 = dma.vmem_to_hbm [thread:$0]  %s302, 128, %s304, %s289
        $region48: #{tpu_custom_call.1} parent=31 // pred_fallthru
          _
      $region32: #{tpu_custom_call.1} parent=5 // pred_fallthru
        _
      %p307 = scmp.le.s32.totalorder 2, %s18
      // Predicated region
      $region49: #{tpu_custom_call.1} parent=5 // pred_check
        %p308 = pneg %p307
      $region50: #{tpu_custom_call.1} parent=5 // pred_check_branch
        %310 = sbr.rel (%p308) target = $region52
      $region51: #{tpu_custom_call.1} parent=5 // pred_region
        %s311 = ssub.s32 %s18, 2
        // Predicated region
        $region53: #{tpu_custom_call.1} parent=51 // pred_check
          %p312 = pneg %p125
        $region54: #{tpu_custom_call.1} parent=51 // pred_check_branch
          %314 = sbr.rel (%p312) target = $region56
        $region55: #{tpu_custom_call.1} parent=51 // pred_region
          %s315 = sand.u32 %s110, 1
          %s316 = scalar_lea.sflag [#allocation4], %s315
          %s317 = sand.u32 %s110, 1
          %s318 = smul.addr %s317, 8
          %s319 = scalar_lea.vmem [#allocation8], %s318
          %321 = dma.done %s316, 128
        $region56: #{tpu_custom_call.1} parent=51 // pred_fallthru
          _
      $region52: #{tpu_custom_call.1} parent=5 // pred_fallthru
        _
    $region6: #{tpu_custom_call.1} parent=1 // loop_footer
      %s22 = sadd.s32 1, %s18
    $region7: #{tpu_custom_call.1} parent=1 // loop_footer_branch
      %17 = sbr.rel target = $region3
    $region8: #{tpu_custom_call.1} parent=1 // loop_exit
      _
    %322 = vsyncpa [#allocation3], 1
    %s323 = scalar_lea.sflag [#allocation3], 1
    %324 = vsyncpa %s323, 1
    %325 = vsyncpa [#allocation6], 1
    %s326 = scalar_lea.sflag [#allocation6], 1
    %327 = vsyncpa %s326, 1
    %328 = vsyncpa [#allocation4], 1
    %s329 = scalar_lea.sflag [#allocation4], 1
    %330 = vsyncpa %s329, 1

</llo_original>
